<compile_context>
chip_gen: v7x
topology: tpu7x:2x2x1
jax: 0.10.0
libtpu: 0.0.40
codegen_flags: <defaults>
</compile_context>

<pallas_src>
import functools

import jax
import jax.numpy as jnp
from jax import lax
from jax.experimental import pallas as pl
from jax.experimental.pallas import tpu as pltpu

LANES = 128
TR_MAX = 2048  # 2048 x 128 x 4B = 1 MiB per f32 input block


def _partial_sq_kernel(o_ref, t_ref, p_ref, *, tr, valid_rows):
    """Per-block partial sum of squared differences -> (1, 128) lane partials."""
    d = o_ref[...].astype(jnp.float32) - t_ref[...].astype(jnp.float32)
    dd = d * d
    if valid_rows is not None:
        # Last block may extend past the array; zero out the invalid rows.
        row0 = pl.program_id(0) * tr
        local = lax.broadcasted_iota(jnp.int32, (tr, 1), 0)
        mask = (local + row0) < valid_rows
        dd = jnp.where(mask, dd, jnp.float32(0.0))
    p_ref[...] = jnp.sum(dd, axis=0, keepdims=True)


def rmse_loss(output, target, lambda_value=1.0, eps=1e-9):
    assert output.shape == target.shape, "output/target must match (like MSELoss)"
    n_elems = output.size

    o_flat = jnp.ravel(output)
    t_flat = jnp.ravel(target)

    bulk_rows = n_elems // LANES
    bulk = bulk_rows * LANES
    tail = n_elems - bulk

    # <128-element tail handled in plain JAX (negligible bytes, avoids jnp.pad
    # materializing full padded copies of both inputs in HBM).
    if tail:
        dt = o_flat[bulk:].astype(jnp.float32) - t_flat[bulk:].astype(jnp.float32)
        extra = jnp.sum(dt * dt)
    else:
        extra = jnp.float32(0.0)

    if bulk_rows == 0:
        total = extra
    else:
        o2d = o_flat[:bulk].reshape(bulk_rows, LANES)
        t2d = t_flat[:bulk].reshape(bulk_rows, LANES)

        # Row tile: big (to amortize ~0.35us/step overhead) but <= full rows.
        tr = bulk_rows if bulk_rows < TR_MAX else TR_MAX
        n_blocks = pl.cdiv(bulk_rows, tr)
        valid_rows = bulk_rows if (bulk_rows % tr) else None  # mask only if needed

        kernel = functools.partial(_partial_sq_kernel, tr=tr, valid_rows=valid_rows)

        partials = pl.pallas_call(
            kernel,
            out_shape=jax.ShapeDtypeStruct((n_blocks, LANES), jnp.float32),
            grid_spec=pl.GridSpec(
                grid=(n_blocks,),
                in_specs=[
                    pl.BlockSpec((tr, LANES), lambda i: (i, 0)),
                    pl.BlockSpec((tr, LANES), lambda i: (i, 0)),
                ],
                out_specs=pl.BlockSpec((1, LANES), lambda i: (i, 0)),
            ),
            compiler_params=pltpu.CompilerParams(
                dimension_semantics=("parallel",),
            ),
        )(o2d, t2d)

        total = jnp.sum(partials) + extra

    # Final scalar math (mean via constant multiply, sqrt, lambda) in the
    # wrapper — a handful of scalar ops, zero extra HBM traffic.
    mse = total * jnp.float32(1.0 / n_elems)
    return jnp.asarray(lambda_value, jnp.float32) * jnp.sqrt(mse + jnp.float32(eps))


if __name__ == "__main__":
    key = jax.random.PRNGKey(0)
    k1, k2 = jax.random.split(key)
    # Small NCHW-shaped inputs, consistent with a typical regression output.
    output = jax.random.normal(k1, (2, 4, 16, 16), dtype=jnp.float32)
    target = jax.random.normal(k2, (2, 4, 16, 16), dtype=jnp.float32)

    loss = rmse_loss(output, target, lambda_value=1.0)
    jax.block_until_ready(loss)

    # Reference check in plain JAX (same math as lambda * sqrt(MSE + eps)).
    ref = 1.0 * jnp.sqrt(jnp.mean((output - target) ** 2) + 1e-9)
    assert jnp.allclose(loss, ref, rtol=1e-6, atol=1e-6), (loss, ref)

    print("KERNEL_OK")
</pallas_src>

<mosaic_0001>
module attributes {stable_mosaic.version = 11 : i64} {
  func.func @_partial_sq_kernel(%arg0: i32, %arg1: memref<16x128xf32, #tpu.memory_space<vmem>>, %arg2: memref<16x128xf32, #tpu.memory_space<vmem>>, %arg3: memref<1x128xf32, #tpu.memory_space<vmem>>) attributes {dimension_semantics = [#tpu.dimension_semantics<parallel>], iteration_bounds = array<i64: 1>, scalar_prefetch = 0 : i64, scratch_operands = 0 : i64, tpu.core_type = #tpu.core_type<tc>, window_params = [{transform_indices = @transform_0, window_bounds = array<i64: 16, 128>}, {transform_indices = @transform_1, window_bounds = array<i64: 16, 128>}, {transform_indices = @transform_2, window_bounds = array<i64: 1, 128>}]} {
    %c0 = arith.constant 0 : index
    %c0_0 = arith.constant 0 : index
    %0 = vector.load %arg1[%c0, %c0_0] : memref<16x128xf32, #tpu.memory_space<vmem>>, vector<16x128xf32>
    %c0_1 = arith.constant 0 : index
    %c0_2 = arith.constant 0 : index
    %1 = vector.load %arg2[%c0_1, %c0_2] : memref<16x128xf32, #tpu.memory_space<vmem>>, vector<16x128xf32>
    %2 = arith.subf %0, %1 : vector<16x128xf32>
    %3 = arith.mulf %2, %2 : vector<16x128xf32>
    %cst = arith.constant dense<0.000000e+00> : vector<128xf32>
    %4 = vector.multi_reduction <add>, %3, %cst [0] : vector<16x128xf32> to vector<128xf32>
    %5 = vector.shape_cast %4 : vector<128xf32> to vector<1x128xf32>
    %c0_3 = arith.constant 0 : index
    %c0_4 = arith.constant 0 : index
    %6 = vector.load %arg3[%c0_3, %c0_4] : memref<1x128xf32, #tpu.memory_space<vmem>>, vector<1x128xf32>
    tpu.vector_store %arg3[%c0_3, %c0_4], %5 {strides = array<i32>} : memref<1x128xf32, #tpu.memory_space<vmem>>, vector<1x128xf32>,
    return
  }
  func.func @transform_0(%arg0: i32) -> (i32, i32) {
    %c0_i32 = arith.constant 0 : i32
    %c0_i32_0 = arith.constant 0 : i32
    return %arg0, %c0_i32 : i32, i32
  }
  func.func @transform_1(%arg0: i32) -> (i32, i32) {
    %c0_i32 = arith.constant 0 : i32
    %c0_i32_0 = arith.constant 0 : i32
    return %arg0, %c0_i32 : i32, i32
  }
  func.func @transform_2(%arg0: i32) -> (i32, i32) {
    %c0_i32 = arith.constant 0 : i32
    %c0_i32_0 = arith.constant 0 : i32
    return %arg0, %c0_i32 : i32, i32
  }
}

</mosaic_0001>

<llo_original>
// kernel: tpu_custom_call.1
$region0: #{tpu_custom_call.1}
  #allocation0 [shape = 'u32[]', space=smem, size = 0x4, offset = 0x4, fixed_abs, tag = 'smem constant byte address 0x4 - core index']
  #allocation1 [shape = 'u32[144,128]{1,0:T(1,128)}', space=vmem, size = 0x12000, scoped, tag = 'internal scratch']
  %s0 = inlined_call_operand.hbm [shape: f32[16,128], index: 0, kind: input, shape index: {}]
  %s1 = inlined_call_operand.hbm [shape: f32[16,128], index: 1, kind: input, shape index: {}]
  %s2 = inlined_call_operand.hbm [shape: f32[1,128], index: 2, kind: output, shape index: {}]
  %s3 = sld [smem:[#allocation0]]
  $region26: #{tpu_custom_call.1} parent=0
    _
  %s5 = ssub.s32 1, %s3
  %s6 = scalar_select 0, %s5, %s3
  $region1: #{tpu_custom_call.1} parent=0
    #allocation2 [shape = 'u8[8192]{0}', space=vmem, size = 0x2000, scoped, tag = 'input window, operand 0, single buffered']
    #allocation3 [shape = 's32[1]{0}', space=sflag, size = 0x4, scoped, tag = 'scoped memory for tpu_custom_call.1']
    #allocation4 [shape = 's32[1]{0}', space=sflag, size = 0x4, scoped, tag = 'scoped memory for tpu_custom_call.1']
    #allocation5 [shape = 'u8[8192]{0}', space=vmem, size = 0x2000, scoped, tag = 'input window, operand 1, single buffered']
    #allocation6 [shape = 's32[1]{0}', space=sflag, size = 0x4, scoped, tag = 'scoped memory for tpu_custom_call.1']
    #allocation7 [shape = 'u8[512]{0}', space=vmem, size = 0x400, scoped, tag = 'output window, operand 0, single buffered']
    %7 = vsyncpa [#allocation3], 0
    %8 = vsyncpa [#allocation6], 0
    %9 = vsyncpa [#allocation4], 0
    // Predicated region
    $region2: #{tpu_custom_call.1} parent=1 // pred_check
      _
    $region3: #{tpu_custom_call.1} parent=1 // pred_check_branch
      %11 = sbr.rel (0) target = $region5
    $region4: #{tpu_custom_call.1} parent=1 // pred_region
      %s13 = ssub.s32 256, 256
      %14 = vsyncadd [#allocation3], %s13
      %s15 = sshll.u32 [#allocation2], 4
      %s16 = int_to_ptr.vmem [resolvable:$true] %s15
      %21 = dma.hbm_to_vmem [thread:$0]  %s0, 256, %s16, [#allocation3], 128, 128, 8
    $region5: #{tpu_custom_call.1} parent=1 // pred_fallthru
      _
    // Predicated region
    $region6: #{tpu_custom_call.1} parent=1 // pred_check
      _
    $region7: #{tpu_custom_call.1} parent=1 // pred_check_branch
      %23 = sbr.rel (0) target = $region9
    $region8: #{tpu_custom_call.1} parent=1 // pred_region
      %s25 = ssub.s32 256, 256
      %26 = vsyncadd [#allocation6], %s25
      %s27 = sshll.u32 [#allocation5], 4
      %s28 = int_to_ptr.vmem [resolvable:$true] %s27
      %33 = dma.hbm_to_vmem [thread:$0]  %s1, 256, %s28, [#allocation6], 128, 128, 8
    $region9: #{tpu_custom_call.1} parent=1 // pred_fallthru
      _
    // Predicated region
    $region10: #{tpu_custom_call.1} parent=1 // pred_check
      _
    $region11: #{tpu_custom_call.1} parent=1 // pred_check_branch
      %35 = sbr.rel (0) target = $region13
    $region12: #{tpu_custom_call.1} parent=1 // pred_region
      %36 = dma.done [#allocation3], 256
    $region13: #{tpu_custom_call.1} parent=1 // pred_fallthru
      _
    // Predicated region
    $region14: #{tpu_custom_call.1} parent=1 // pred_check
      _
    $region15: #{tpu_custom_call.1} parent=1 // pred_check_branch
      %38 = sbr.rel (0) target = $region17
    $region16: #{tpu_custom_call.1} parent=1 // pred_region
      %39 = dma.done [#allocation6], 256
    $region17: #{tpu_custom_call.1} parent=1 // pred_fallthru
      _
    %v40 = vld [vmem:[#allocation2] sm:$0xff]
    %v41 = vld [vmem:[#allocation2 + $0x8] sm:$0xff]
    %v42 = vld [vmem:[#allocation5] sm:$0xff]
    %v43 = vld [vmem:[#allocation5 + $0x8] sm:$0xff]
    %v44 = vsub.f32 %v40, %v42
    %v45 = vsub.f32 %v41, %v43
    %v46 = vmul.f32 %v44, %v44
    %v47 = vmul.f32 %v45, %v45
    %v48 = vadd.f32 %v46, %v47
    %v49 = vrot.slane %v48, 4
    %v50 = vadd.f32 %v48, %v49
    %v51 = vrot.slane %v50, 2
    %v52 = vadd.f32 %v50, %v51
    %v53 = vrot.slane %v52, 1
    %v54 = vadd.f32 %v52, %v53
    %55 = vst [vmem:[#allocation7] sm:$0x1] %v54
    // Predicated region
    $region18: #{tpu_custom_call.1} parent=1 // pred_check
      _
    $region19: #{tpu_custom_call.1} parent=1 // pred_check_branch
      %57 = sbr.rel (0) target = $region21
    $region20: #{tpu_custom_call.1} parent=1 // pred_region
      %s59 = ssub.s32 16, 16
      %60 = vsyncadd [#allocation4], %s59
      %s62 = sshll.u32 [#allocation7], 4
      %s63 = int_to_ptr.vmem [resolvable:$true] %s62
      %65 = dma.vmem_to_hbm [thread:$0]  %s63, 16, %s2, [#allocation4]
    $region21: #{tpu_custom_call.1} parent=1 // pred_fallthru
      _
    // Predicated region
    $region22: #{tpu_custom_call.1} parent=1 // pred_check
      _
    $region23: #{tpu_custom_call.1} parent=1 // pred_check_branch
      %67 = sbr.rel (0) target = $region25
    $region24: #{tpu_custom_call.1} parent=1 // pred_region
      %68 = dma.done [#allocation4], 16
    $region25: #{tpu_custom_call.1} parent=1 // pred_fallthru
      _
    %69 = vsyncpa [#allocation3], 1
    %70 = vsyncpa [#allocation6], 1
    %71 = vsyncpa [#allocation4], 1

</llo_original>
